<compile_context>
chip_gen: v7x
topology: tpu7x:2x2x1
jax: 0.10.0
libtpu: 0.0.40
codegen_flags: <defaults>
</compile_context>

<pallas_src>
import functools
import math

import jax
import jax.numpy as jnp
from jax.experimental import pallas as pl
from jax.experimental.pallas import tpu as pltpu

# Frozen module parameters sx=0, sq=-3 -> constants exp(3) and -3.
_SQ = -3.0
_EXP3 = float(math.exp(3.0))

_LANES = 128
# Slab path: 4096 rows * 128 lanes * 4 B = 2 MiB per f32 input block;
# 2 inputs x 2 pipeline buffers = 8 MiB -> fits v5e's 16 MiB scoped default.
_SLAB_BLOCK_ROWS = 4096
# Fast path: total lane-padded VMEM across the 4 inputs must stay small.
_FAST_VMEM_BUDGET = 4 * 1024 * 1024


def _round_up(x, m):
    return ((x + m - 1) // m) * m


def _sublane_tile(dtype):
    """Packed sublane tile height for a dtype: 8 (32-bit), 16 (16-bit), 32 (8-bit)."""
    bits = jnp.dtype(dtype).itemsize * 8
    if bits >= 32:
        return 8
    if bits == 16:
        return 16
    return 32


def _as_2d(x):
    if x.ndim == 2:
        return x
    if x.ndim == 0:
        return x.reshape(1, 1)
    return x.reshape(-1, x.shape[-1])


def _padded_vmem_bytes_2d(x):
    sub = _sublane_tile(x.dtype)
    r = _round_up(max(x.shape[0], 1), sub)
    c = _round_up(max(x.shape[-1], 1), _LANES)
    return r * c * jnp.dtype(x.dtype).itemsize


# ----------------------------------------------------------------------------
# Fast path: single block, four direct inputs, no repack / mask / accumulators.
# ----------------------------------------------------------------------------
def _pose_loss_small_kernel(t_ref, q_ref, yt_ref, yq_ref, out_ref):
    dt = jnp.abs(t_ref[...].astype(jnp.float32) - yt_ref[...].astype(jnp.float32))
    dq = jnp.abs(q_ref[...].astype(jnp.float32) - yq_ref[...].astype(jnp.float32))
    out_ref[0] = jnp.sum(dt)
    out_ref[1] = jnp.sum(dq)


def _pose_sums_fast(t, q, y_t, y_q):
    return pl.pallas_call(
        _pose_loss_small_kernel,
        out_shape=jax.ShapeDtypeStruct((2,), jnp.float32),
        in_specs=[pl.BlockSpec(memory_space=pltpu.VMEM)] * 4,
        out_specs=pl.BlockSpec(memory_space=pltpu.SMEM),
    )(t, q, y_t, y_q)


# ----------------------------------------------------------------------------
# Large-batch path: lane-dense [t | q] slab, streaming accumulation grid.
# ----------------------------------------------------------------------------
def _pose_loss_slab_kernel(pred_ref, tgt_ref, out_ref, acc_ref, *,
                           block_rows, t_rows):
    """pred/tgt: (block_rows, 128) blocks of the packed slab.

    Rows [0, t_rows) of the slab hold the (zero-padded) translation elements;
    rows >= t_rows hold the (zero-padded) quaternion elements, so zero padding
    contributes 0 to |diff| and the true element counts are used wrapper-side.
    acc_ref: (2, 8, 128) f32 VMEM accumulator, persistent over the grid.
    out_ref: (2,) f32 SMEM -> [sum_t, sum_q], written on the last step only.
    """
    i = pl.program_id(0)

    @pl.when(i == 0)
    def _init():
        acc_ref[...] = jnp.zeros_like(acc_ref)

    d = jnp.abs(pred_ref[...].astype(jnp.float32)
                - tgt_ref[...].astype(jnp.float32))
    # (block_rows, 128) -> (block_rows//8, 8, 128): pure vreg regrouping;
    # the axis-0 sum is a chain of VALU adds (no XLU in the steady state).
    d3 = d.reshape(block_rows // 8, 8, _LANES)

    row0 = i * block_rows
    nt_rows = jnp.clip(t_rows - row0, 0, block_rows)  # #t-rows in this block

    @pl.when(nt_rows == block_rows)          # block entirely translation
    def _all_t():
        acc_ref[0] += jnp.sum(d3, axis=0)

    @pl.when(nt_rows == 0)                   # block entirely quaternion
    def _all_q():
        acc_ref[1] += jnp.sum(d3, axis=0)

    @pl.when(jnp.logical_and(nt_rows > 0, nt_rows < block_rows))
    def _boundary():                         # at most one block pays the mask
        r = jax.lax.broadcasted_iota(jnp.int32, d.shape, 0)
        d_t = jnp.where(r < nt_rows, d, 0.0)
        d_q = d - d_t
        acc_ref[0] += jnp.sum(d_t.reshape(block_rows // 8, 8, _LANES), axis=0)
        acc_ref[1] += jnp.sum(d_q.reshape(block_rows // 8, 8, _LANES), axis=0)

    @pl.when(i == pl.num_programs(0) - 1)
    def _finalize():                         # the only cross-lane reduces
        out_ref[0] = jnp.sum(acc_ref[0])
        out_ref[1] = jnp.sum(acc_ref[1])


def _pose_sums_slab(t, q, y_t, y_q, block_rows):
    n_t = int(t.size)
    n_q = int(q.size)
    dtype = jnp.result_type(t.dtype, q.dtype, y_t.dtype, y_q.dtype)
    sub = _sublane_tile(dtype)

    # Pad each segment to a 128-lane row boundary so the t/q split is
    # row-aligned (boundary block needs only a sublane iota).
    t_rows = _round_up(n_t, _LANES) // _LANES
    q_rows = _round_up(n_q, _LANES) // _LANES
    rows = t_rows + q_rows

    block_rows = _round_up(min(int(block_rows), _round_up(rows, sub)), sub)
    padded_rows = _round_up(rows, block_rows)

    def pack(a, b):
        av = a.reshape(-1).astype(dtype)
        bv = b.reshape(-1).astype(dtype)
        flat = jnp.concatenate([
            jnp.pad(av, (0, t_rows * _LANES - n_t)),
            jnp.pad(bv, (0, q_rows * _LANES - n_q)),
        ])
        flat = jnp.pad(flat, (0, (padded_rows - rows) * _LANES))
        return flat.reshape(padded_rows, _LANES)

    pred = pack(t, q)
    tgt = pack(y_t, y_q)

    kernel = functools.partial(_pose_loss_slab_kernel,
                               block_rows=block_rows, t_rows=t_rows)
    return pl.pallas_call(
        kernel,
        out_shape=jax.ShapeDtypeStruct((2,), jnp.float32),
        grid=(padded_rows // block_rows,),
        in_specs=[pl.BlockSpec((block_rows, _LANES), lambda i: (i, 0)),
                  pl.BlockSpec((block_rows, _LANES), lambda i: (i, 0))],
        out_specs=pl.BlockSpec(memory_space=pltpu.SMEM),
        scratch_shapes=[pltpu.VMEM((2, 8, _LANES), jnp.float32)],
        compiler_params=pltpu.CompilerParams(
            dimension_semantics=("arbitrary",)),
    )(pred, tgt)


# ----------------------------------------------------------------------------
# Public wrapper.
# ----------------------------------------------------------------------------
@functools.partial(jax.jit, static_argnames=("force_slab", "block_rows"))
def pose_loss(t, q, y_t, y_q, *, force_slab=False, block_rows=_SLAB_BLOCK_ROWS):
    """Pallas implementation of PoseLoss.forward.

    Args:
      t, y_t: (B, 3) predicted / target translations.
      q, y_q: (B, 4) predicted / target quaternions.
    Returns:
      (loss, loss_t, loss_q) as float32 device scalars.
    """
    n_t = int(t.size)
    n_q = int(q.size)

    t2, q2, yt2, yq2 = map(_as_2d, (t, q, y_t, y_q))
    fast_bytes = sum(_padded_vmem_bytes_2d(a) for a in (t2, q2, yt2, yq2))

    if (not force_slab) and fast_bytes <= _FAST_VMEM_BUDGET:
        sums = _pose_sums_fast(t2, q2, yt2, yq2)
    else:
        sums = _pose_sums_slab(t, q, y_t, y_q, block_rows)

    # Free wrapper-side scalar math: true-count means, frozen-weight combine.
    loss_t = sums[0] / jnp.float32(n_t)
    loss_q = sums[1] / jnp.float32(n_q)
    loss = loss_t + jnp.float32(_EXP3) * loss_q + jnp.float32(_SQ)
    return loss, loss_t, loss_q


if __name__ == "__main__":
    key = jax.random.PRNGKey(0)
    k1, k2, k3, k4 = jax.random.split(key, 4)

    # Small shapes matching the module: t/y_t -> (B, 3), q/y_q -> (B, 4).
    B = 8
    t = jax.random.normal(k1, (B, 3), dtype=jnp.float32)
    y_t = jax.random.normal(k2, (B, 3), dtype=jnp.float32)
    q = jax.random.normal(k3, (B, 4), dtype=jnp.float32)
    y_q = jax.random.normal(k4, (B, 4), dtype=jnp.float32)

    loss, loss_t, loss_q = pose_loss(t, q, y_t, y_q)   # fast path
    jax.block_until_ready((loss, loss_t, loss_q))

    ref_t = jnp.mean(jnp.abs(t - y_t))
    ref_q = jnp.mean(jnp.abs(q - y_q))
    ref_loss = ref_t + _EXP3 * ref_q - 3.0
    assert jnp.allclose(loss_t, ref_t, rtol=1e-5, atol=1e-6)
    assert jnp.allclose(loss_q, ref_q, rtol=1e-5, atol=1e-6)
    assert jnp.allclose(loss, ref_loss, rtol=1e-5, atol=1e-5)

    # Exercise the multi-block slab path (all three branches) with a tiny block.
    B2 = 512
    kk = jax.random.split(jax.random.PRNGKey(1), 4)
    t2 = jax.random.normal(kk[0], (B2, 3), dtype=jnp.float32)
    y_t2 = jax.random.normal(kk[1], (B2, 3), dtype=jnp.float32)
    q2 = jax.random.normal(kk[2], (B2, 4), dtype=jnp.float32)
    y_q2 = jax.random.normal(kk[3], (B2, 4), dtype=jnp.float32)
    loss2, lt2, lq2 = pose_loss(t2, q2, y_t2, y_q2, force_slab=True, block_rows=8)
    jax.block_until_ready((loss2, lt2, lq2))
    ref_t2 = jnp.mean(jnp.abs(t2 - y_t2))
    ref_q2 = jnp.mean(jnp.abs(q2 - y_q2))
    ref_loss2 = ref_t2 + _EXP3 * ref_q2 - 3.0
    assert jnp.allclose(lt2, ref_t2, rtol=1e-5, atol=1e-6)
    assert jnp.allclose(lq2, ref_q2, rtol=1e-5, atol=1e-6)
    assert jnp.allclose(loss2, ref_loss2, rtol=1e-5, atol=1e-5)

    # bf16 slab path (16-row packed tiles, boundary block masking).
    B3 = 300
    kb = jax.random.split(jax.random.PRNGKey(2), 4)
    t3 = jax.random.normal(kb[0], (B3, 3), dtype=jnp.bfloat16)
    y_t3 = jax.random.normal(kb[1], (B3, 3), dtype=jnp.bfloat16)
    q3 = jax.random.normal(kb[2], (B3, 4), dtype=jnp.bfloat16)
    y_q3 = jax.random.normal(kb[3], (B3, 4), dtype=jnp.bfloat16)
    loss3, lt3, lq3 = pose_loss(t3, q3, y_t3, y_q3, force_slab=True, block_rows=16)
    jax.block_until_ready((loss3, lt3, lq3))
    ref_t3 = jnp.mean(jnp.abs(t3.astype(jnp.float32) - y_t3.astype(jnp.float32)))
    ref_q3 = jnp.mean(jnp.abs(q3.astype(jnp.float32) - y_q3.astype(jnp.float32)))
    ref_loss3 = ref_t3 + _EXP3 * ref_q3 - 3.0
    assert jnp.allclose(lt3, ref_t3, rtol=1e-4, atol=1e-5)
    assert jnp.allclose(lq3, ref_q3, rtol=1e-4, atol=1e-5)
    assert jnp.allclose(loss3, ref_loss3, rtol=1e-4, atol=1e-4)

    print("KERNEL_OK")
</pallas_src>

<mosaic_0001>
module attributes {stable_mosaic.version = 11 : i64} {
  func.func @_pose_loss_small_kernel(%arg0: memref<8x3xf32, #tpu.memory_space<vmem>>, %arg1: memref<8x4xf32, #tpu.memory_space<vmem>>, %arg2: memref<8x3xf32, #tpu.memory_space<vmem>>, %arg3: memref<8x4xf32, #tpu.memory_space<vmem>>, %arg4: memref<2xf32, #tpu.memory_space<smem>>) attributes {dimension_semantics = [], scalar_prefetch = 0 : i64, scratch_operands = 0 : i64, tpu.core_type = #tpu.core_type<tc>} {
    %c0 = arith.constant 0 : index
    %c0_0 = arith.constant 0 : index
    %0 = vector.load %arg0[%c0, %c0_0] : memref<8x3xf32, #tpu.memory_space<vmem>>, vector<8x3xf32>
    %c0_1 = arith.constant 0 : index
    %c0_2 = arith.constant 0 : index
    %1 = vector.load %arg2[%c0_1, %c0_2] : memref<8x3xf32, #tpu.memory_space<vmem>>, vector<8x3xf32>
    %2 = arith.subf %0, %1 : vector<8x3xf32>
    %3 = math.absf %2 : vector<8x3xf32>
    %c0_3 = arith.constant 0 : index
    %c0_4 = arith.constant 0 : index
    %4 = vector.load %arg1[%c0_3, %c0_4] : memref<8x4xf32, #tpu.memory_space<vmem>>, vector<8x4xf32>
    %c0_5 = arith.constant 0 : index
    %c0_6 = arith.constant 0 : index
    %5 = vector.load %arg3[%c0_5, %c0_6] : memref<8x4xf32, #tpu.memory_space<vmem>>, vector<8x4xf32>
    %6 = arith.subf %4, %5 : vector<8x4xf32>
    %7 = math.absf %6 : vector<8x4xf32>
    %8 = vector.shape_cast %3 : vector<8x3xf32> to vector<1x8x3xf32>
    %cst = arith.constant dense<0.000000e+00> : vector<1xf32>
    %9 = vector.multi_reduction <add>, %8, %cst [1, 2] : vector<1x8x3xf32> to vector<1xf32>
    %10 = vector.shape_cast %9 : vector<1xf32> to vector<1x1x1xf32>
    %11 = vector.extract %10[0, 0, 0] : f32 from vector<1x1x1xf32>
    %c0_7 = arith.constant 0 : index
    %12 = memref.load %arg4[%c0_7] : memref<2xf32, #tpu.memory_space<smem>>
    memref.store %11, %arg4[%c0_7] : memref<2xf32, #tpu.memory_space<smem>>
    %13 = vector.shape_cast %7 : vector<8x4xf32> to vector<1x8x4xf32>
    %cst_8 = arith.constant dense<0.000000e+00> : vector<1xf32>
    %14 = vector.multi_reduction <add>, %13, %cst_8 [1, 2] : vector<1x8x4xf32> to vector<1xf32>
    %15 = vector.shape_cast %14 : vector<1xf32> to vector<1x1x1xf32>
    %16 = vector.extract %15[0, 0, 0] : f32 from vector<1x1x1xf32>
    %c1 = arith.constant 1 : index
    %17 = memref.load %arg4[%c1] : memref<2xf32, #tpu.memory_space<smem>>
    memref.store %16, %arg4[%c1] : memref<2xf32, #tpu.memory_space<smem>>
    return
  }
}

</mosaic_0001>

<llo_original>
// kernel: pose_loss.1
$region0: #{pose_loss.1}
  #allocation0 [shape = 'u32[]', space=smem, size = 0x4, offset = 0x4, fixed_abs, tag = 'smem constant byte address 0x4 - core index']
  #allocation1 [shape = 'u32[144,128]{1,0:T(1,128)}', space=vmem, size = 0x12000, scoped, tag = 'internal scratch']
  %s0 = inlined_call_operand.vmem [shape: f32[8,3], index: 0, kind: input, shape index: {}]
  %s1 = inlined_call_operand.vmem [shape: f32[8,4], index: 1, kind: input, shape index: {}]
  %s2 = inlined_call_operand.vmem [shape: f32[8,3], index: 2, kind: input, shape index: {}]
  %s3 = inlined_call_operand.vmem [shape: f32[8,4], index: 3, kind: input, shape index: {}]
  %s4 = inlined_call_operand.vmem [shape: f32[2], index: 4, kind: output, shape index: {}]
  %s5 = sld [smem:[#allocation0]]
  $region26: #{pose_loss.1} parent=0
    _
  %s7 = ssub.s32 1, %s5
  %s8 = scalar_select 0, %s7, %s5
  $region1: #{pose_loss.1} parent=0
    #allocation2 [shape = 'u8[512]{0}', space=smem, size = 0x200, scoped, tag = 'output window, operand 0, single buffered']
    #allocation3 [shape = 's32[1]{0}', space=sflag, size = 0x4, scoped, tag = 'scoped memory for pose_loss.1']
    %9 = vsyncpa [#allocation3], 0
    // Predicated region
    $region2: #{pose_loss.1} parent=1 // pred_check
      _
    $region3: #{pose_loss.1} parent=1 // pred_check_branch
      %11 = sbr.rel (0) target = $region5
    $region4: #{pose_loss.1} parent=1 // pred_region
      _
    $region5: #{pose_loss.1} parent=1 // pred_fallthru
      _
    // Predicated region
    $region6: #{pose_loss.1} parent=1 // pred_check
      _
    $region7: #{pose_loss.1} parent=1 // pred_check_branch
      %13 = sbr.rel (0) target = $region9
    $region8: #{pose_loss.1} parent=1 // pred_region
      _
    $region9: #{pose_loss.1} parent=1 // pred_fallthru
      _
    // Predicated region
    $region10: #{pose_loss.1} parent=1 // pred_check
      _
    $region11: #{pose_loss.1} parent=1 // pred_check_branch
      %15 = sbr.rel (0) target = $region13
    $region12: #{pose_loss.1} parent=1 // pred_region
      _
    $region13: #{pose_loss.1} parent=1 // pred_fallthru
      _
    // Predicated region
    $region14: #{pose_loss.1} parent=1 // pred_check
      _
    $region15: #{pose_loss.1} parent=1 // pred_check_branch
      %17 = sbr.rel (0) target = $region17
    $region16: #{pose_loss.1} parent=1 // pred_region
      _
    $region17: #{pose_loss.1} parent=1 // pred_fallthru
      _
    %v18 = vld [vmem:[%s0] sm:$0xff]
    %v19 = vld [vmem:[%s2] sm:$0xff]
    %v20 = vsub.f32 %v18, %v19
    %v21 = vand.u32 2147483647, %v20
    %v22 = vld [vmem:[%s1] sm:$0xff]
    %v23 = vld [vmem:[%s3] sm:$0xff]
    %v24 = vsub.f32 %v22, %v23
    %v25 = vand.u32 2147483647, %v24
    %vm26 = vcmask 23552
    %v27 = vsel %vm26, %v21, 0.0
    %28 = vadd.xlane.f32.xlu0 %v27
    %v29 = vpop.xlane.xlu0 %28
    %v30 = vrot.slane %v29, 4
    %v31 = vadd.f32 %v29, %v30
    %v32 = vrot.slane %v31, 2
    %v33 = vadd.f32 %v31, %v32
    %v34 = vrot.slane %v33, 1
    %v35 = vadd.f32 %v33, %v34
    %s36 = vtos %v35
    %s37 = scalar_lea.smem [#allocation2], 0
    %38 = sst [smem:[%s37]] %s36
    %vm39 = vcmask 31744
    %v40 = vsel %vm39, %v25, 0.0
    %41 = vadd.xlane.f32.xlu0 %v40
    %v42 = vpop.xlane.xlu0 %41
    %v43 = vrot.slane %v42, 4
    %v44 = vadd.f32 %v42, %v43
    %v45 = vrot.slane %v44, 2
    %v46 = vadd.f32 %v44, %v45
    %v47 = vrot.slane %v46, 1
    %v48 = vadd.f32 %v46, %v47
    %s49 = vtos %v48
    %s50 = scalar_lea.smem [#allocation2], 1
    %51 = sst [smem:[%s50]] %s49
    // Predicated region
    $region18: #{pose_loss.1} parent=1 // pred_check
      _
    $region19: #{pose_loss.1} parent=1 // pred_check_branch
      %53 = sbr.rel (0) target = $region21
    $region20: #{pose_loss.1} parent=1 // pred_region
      %s55 = ssub.s32 16, 16
      %56 = vsyncadd [#allocation3], %s55
      %s58 = sshll.u32 %s4, 4
      %s59 = int_to_ptr.vmem [resolvable:$true] %s58
      %61 = dma.smem_to_vmem [#allocation2], 16, %s59, [#allocation3]
    $region21: #{pose_loss.1} parent=1 // pred_fallthru
      _
    // Predicated region
    $region22: #{pose_loss.1} parent=1 // pred_check
      _
    $region23: #{pose_loss.1} parent=1 // pred_check_branch
      %63 = sbr.rel (0) target = $region25
    $region24: #{pose_loss.1} parent=1 // pred_region
      %64 = dma.done [#allocation3], 16
    $region25: #{pose_loss.1} parent=1 // pred_fallthru
      _
    %65 = sfence
    %66 = vsyncpa [#allocation3], 1

</llo_original>
